<compile_context>
chip_gen: v7x
topology: tpu7x:2x2x1
jax: 0.10.0
libtpu: 0.0.40
codegen_flags: <defaults>
</compile_context>

<pallas_src>
import math
import functools

import jax
import jax.numpy as jnp
from jax import lax
from jax.experimental import pallas as pl
from jax.experimental.pallas import tpu as pltpu

_EPS = 1e-8  # gLN epsilon (asteroid / Conv-TasNet convention)


def _round_up(a, b):
    return -(-a // b) * b


def _cdiv(a, b):
    return -(-a // b)


def _physical_vmem_bytes():
    try:
        return int(pltpu.get_tpu_info().vmem_capacity_bytes)
    except Exception:
        return 64 << 20  # conservative default (v7x per-core VMEM)


def _vmem_limit_bytes(need_bytes):
    """Explicit scoped-VMEM budget: requested bytes + slack, capped below physical."""
    phys = _physical_vmem_bytes()
    cap = max(phys - (8 << 20), 4 << 20)
    return int(min(max(need_bytes + (2 << 20), 4 << 20), cap))


# --------------------------------------------------------------------------------
# Fused single-pass kernel: conv matmul + gLN (input-side Gram trick) + affine.
# Grid (B, NT); output block (1, Cout, T_out) is resident across the t axis.
# --------------------------------------------------------------------------------
def _fused_conv_gln_kernel(p_ref, w_ref, gamma_ref, beta_ref, o_ref, s_acc, g_acc,
                           *, nt, tt, t_rem, cout, t_out, eps):
    """
    p_ref:     (1, CK, TT)       patch tile (tail columns past T_out are zero)
    w_ref:     (Cout, CK)        conv weight (resident)
    gamma_ref: (Cout, 1)         gLN weight
    beta_ref:  (Cout, 1)         gLN bias
    o_ref:     (1, Cout, T_out)  output block, resident in VMEM across t
    s_acc:     (CK, 1)           scratch: sum_t P[:, t]
    g_acc:     (CK, CK)          scratch: P @ P^T
    """
    t = pl.program_id(1)

    @pl.when(t == 0)
    def _init():
        s_acc[...] = jnp.zeros_like(s_acc)
        g_acc[...] = jnp.zeros_like(g_acc)

    p = p_ref[0]                                                   # (CK, TT)
    w = w_ref[...]                                                 # (Cout, CK)

    # Input-side gLN statistics (zero-padded tail columns contribute nothing).
    s_acc[...] += jnp.sum(p, axis=1, keepdims=True)                # (CK, 1)
    g_acc[...] += lax.dot_general(p, p, (((1,), (1,)), ((), ())),
                                  preferred_element_type=jnp.float32)

    # Conv as matmul; stash the un-normalized tile into the resident output block.
    y = jnp.dot(w, p, preferred_element_type=jnp.float32)          # (Cout, TT)

    if nt > 1:  # static: only emit the full-width store when TT actually fits
        @pl.when(t < nt - 1)
        def _body():
            start = pl.multiple_of(t * tt, 128)
            o_ref[0, :, pl.ds(start, tt)] = y.astype(o_ref.dtype)

    @pl.when(t == nt - 1)
    def _tail():
        # Ragged last tile: write exactly the valid columns.
        o_ref[0, :, pl.ds((nt - 1) * tt, t_rem)] = y[:, :t_rem].astype(o_ref.dtype)
        # Finalize gLN from the input-side sums, fold into scale/shift, apply in place.
        sum_y = jnp.sum(jnp.dot(w, s_acc[...], preferred_element_type=jnp.float32))
        sum_y2 = jnp.sum(jnp.dot(w, g_acc[...], preferred_element_type=jnp.float32) * w)
        inv_n = 1.0 / float(cout * t_out)
        mean = sum_y * inv_n
        var = jnp.maximum(sum_y2 * inv_n - mean * mean, 0.0)
        inv_std = lax.rsqrt(var + eps)                              # EUP rsqrt
        scale = gamma_ref[...] * inv_std                            # (Cout, 1)
        shift = beta_ref[...] - mean * scale                        # (Cout, 1)
        yo = o_ref[0].astype(jnp.float32)
        o_ref[0] = (yo * scale + shift).astype(o_ref.dtype)


# --------------------------------------------------------------------------------
# Two-pass fallback (for clips whose resident output block would not fit in VMEM).
# --------------------------------------------------------------------------------
def _gln_stats_kernel(p_ref, w_ref, gamma_ref, beta_ref, scale_ref, shift_ref,
                      s_acc, g_acc, *, cout, t_out, eps):
    t = pl.program_id(1)

    @pl.when(t == 0)
    def _init():
        s_acc[...] = jnp.zeros_like(s_acc)
        g_acc[...] = jnp.zeros_like(g_acc)

    p = p_ref[0]                                                   # (CK, TT)
    s_acc[...] += jnp.sum(p, axis=1, keepdims=True)
    g_acc[...] += lax.dot_general(p, p, (((1,), (1,)), ((), ())),
                                  preferred_element_type=jnp.float32)

    @pl.when(t == pl.num_programs(1) - 1)
    def _finalize():
        w = w_ref[...]
        sum_y = jnp.sum(jnp.dot(w, s_acc[...], preferred_element_type=jnp.float32))
        sum_y2 = jnp.sum(jnp.dot(w, g_acc[...], preferred_element_type=jnp.float32) * w)
        inv_n = 1.0 / float(cout * t_out)
        mean = sum_y * inv_n
        var = jnp.maximum(sum_y2 * inv_n - mean * mean, 0.0)
        inv_std = lax.rsqrt(var + eps)
        scale = gamma_ref[...] * inv_std
        scale_ref[0] = scale
        shift_ref[0] = beta_ref[...] - mean * scale


def _conv_affine_kernel(p_ref, w_ref, scale_ref, shift_ref, o_ref):
    y = jnp.dot(w_ref[...], p_ref[0], preferred_element_type=jnp.float32)
    o_ref[0] = (y * scale_ref[0] + shift_ref[0]).astype(o_ref.dtype)


# --------------------------------------------------------------------------------
# Wrapper for one ConvNormAct layer.
# --------------------------------------------------------------------------------
def conv_norm_act_pallas(x, weight, gamma, beta, stride, dilation, *,
                         tile_t=2048, out_dtype=jnp.float32, force_two_pass=False):
    """ConvNormAct(in->out, K, stride, dilation, gLN, act=None, bias=False).

    x:      (B, Cin, T) float32   (PyTorch NCW layout)
    weight: (Cout, Cin, K)
    gamma, beta: (Cout,)
    returns (B, Cout, T_out) out_dtype  (NCW)
    """
    B, Cin, T = x.shape
    Cout, _, K = weight.shape

    pad = ((K - 1) // 2) * dilation                    # ConvNormAct "same-ish" padding
    x_pad = jnp.pad(x, ((0, 0), (0, 0), (pad, pad)))
    Tp = T + 2 * pad
    T_out = (Tp - dilation * (K - 1) - 1) // stride + 1

    CK = Cin * K
    TT = min(_round_up(tile_t, 128), _round_up(T_out, 128))
    NT = _cdiv(T_out, TT)
    LT = NT * TT
    T_rem = T_out - (NT - 1) * TT

    # Lane-dense im2col via strided basic slices (no gather, no channel transpose):
    # patches[b, ci*K + k, t] = x_pad[b, ci, t*stride + k*dilation].  Tail columns
    # past T_out are zero so gLN sums over full tiles stay exact.
    # TODO(synk): build these rows in-kernel from a halo'd x window (manual DMA /
    # Element-indexed BlockSpec) to remove this small HBM materialization
    # (~CK/stride x the waveform size).
    rows = []
    for ci in range(Cin):
        for k in range(K):
            start = k * dilation
            stop = start + (T_out - 1) * stride + 1
            rows.append(x_pad[:, ci:ci + 1, start:stop:stride])     # (B, 1, T_out)
    patches = jnp.concatenate(rows, axis=1).astype(jnp.float32)     # (B, CK, T_out)
    if LT != T_out:
        patches = jnp.pad(patches, ((0, 0), (0, 0), (0, LT - T_out)))

    w2 = weight.reshape(Cout, CK).astype(jnp.float32)               # (Cout, CK)
    gamma2 = gamma.reshape(Cout, 1).astype(jnp.float32)
    beta2 = beta.reshape(Cout, 1).astype(jnp.float32)

    itemsize = jnp.dtype(out_dtype).itemsize
    fused_need = (2 * Cout * T_out * itemsize        # resident output block (double buffered)
                  + 2 * CK * TT * 4                  # patch tile double buffer
                  + Cout * CK * 4 + 4 * Cout * 4     # weight + gamma/beta (+ margins)
                  + (CK + CK * CK) * 4)              # s/G scratch
    phys = _physical_vmem_bytes()
    use_fused = (not force_two_pass) and (fused_need + (4 << 20) <= phys * 3 // 4)

    if use_fused:
        # Single pass: patches read once, output written once.  Note: the t axis is a
        # reduction (resident output + stats) so it must be "arbitrary"; at B == 1 on
        # v7x this path forgoes cross-TC sharding in exchange for ~25% less HBM traffic.
        return pl.pallas_call(
            functools.partial(_fused_conv_gln_kernel, nt=NT, tt=TT, t_rem=T_rem,
                              cout=Cout, t_out=T_out, eps=_EPS),
            out_shape=jax.ShapeDtypeStruct((B, Cout, T_out), out_dtype),
            grid_spec=pltpu.PrefetchScalarGridSpec(
                num_scalar_prefetch=0,
                grid=(B, NT),
                in_specs=[
                    pl.BlockSpec((1, CK, TT), lambda b, t: (b, 0, t)),
                    pl.BlockSpec((Cout, CK), lambda b, t: (0, 0)),
                    pl.BlockSpec((Cout, 1), lambda b, t: (0, 0)),
                    pl.BlockSpec((Cout, 1), lambda b, t: (0, 0)),
                ],
                out_specs=pl.BlockSpec((1, Cout, T_out), lambda b, t: (b, 0, 0)),
                scratch_shapes=[
                    pltpu.VMEM((CK, 1), jnp.float32),
                    pltpu.VMEM((CK, CK), jnp.float32),
                ]),
            compiler_params=pltpu.CompilerParams(
                dimension_semantics=("parallel", "arbitrary"),
                vmem_limit_bytes=_vmem_limit_bytes(fused_need)),
        )(patches, w2, gamma2, beta2)

    # ---- two-pass fallback: pass 1 = gLN statistics (t axis is a reduction) ----
    stats_need = 2 * CK * TT * 4 + Cout * CK * 4 + 8 * Cout * 4 + (CK + CK * CK) * 4
    scale, shift = pl.pallas_call(
        functools.partial(_gln_stats_kernel, cout=Cout, t_out=T_out, eps=_EPS),
        out_shape=(jax.ShapeDtypeStruct((B, Cout, 1), jnp.float32),
                   jax.ShapeDtypeStruct((B, Cout, 1), jnp.float32)),
        grid_spec=pltpu.PrefetchScalarGridSpec(
            num_scalar_prefetch=0,
            grid=(B, NT),
            in_specs=[
                pl.BlockSpec((1, CK, TT), lambda b, t: (b, 0, t)),
                pl.BlockSpec((Cout, CK), lambda b, t: (0, 0)),
                pl.BlockSpec((Cout, 1), lambda b, t: (0, 0)),
                pl.BlockSpec((Cout, 1), lambda b, t: (0, 0)),
            ],
            out_specs=[
                pl.BlockSpec((1, Cout, 1), lambda b, t: (b, 0, 0)),
                pl.BlockSpec((1, Cout, 1), lambda b, t: (b, 0, 0)),
            ],
            scratch_shapes=[
                pltpu.VMEM((CK, 1), jnp.float32),
                pltpu.VMEM((CK, CK), jnp.float32),
            ]),
        compiler_params=pltpu.CompilerParams(
            dimension_semantics=("parallel", "arbitrary"),
            vmem_limit_bytes=_vmem_limit_bytes(stats_need)),
    )(patches, w2, gamma2, beta2)

    # ---- pass 2: conv matmul + folded affine.  Exact T_out output, ragged last block
    # masked by Pallas.  Both axes independent -> "parallel"/"parallel" so megacore
    # (v7x, 2 TCs) can split the time axis even at B == 1. ----
    OT = TT if NT > 1 else T_out
    conv_need = 2 * (CK * TT * 4 + Cout * OT * itemsize) + Cout * CK * 4 + 8 * Cout * 4
    out = pl.pallas_call(
        _conv_affine_kernel,
        out_shape=jax.ShapeDtypeStruct((B, Cout, T_out), out_dtype),
        grid_spec=pltpu.PrefetchScalarGridSpec(
            num_scalar_prefetch=0,
            grid=(B, NT),
            in_specs=[
                pl.BlockSpec((1, CK, TT), lambda b, t: (b, 0, t)),
                pl.BlockSpec((Cout, CK), lambda b, t: (0, 0)),
                pl.BlockSpec((1, Cout, 1), lambda b, t: (b, 0, 0)),
                pl.BlockSpec((1, Cout, 1), lambda b, t: (b, 0, 0)),
            ],
            out_specs=pl.BlockSpec((1, Cout, OT), lambda b, t: (b, 0, t))),
        compiler_params=pltpu.CompilerParams(
            dimension_semantics=("parallel", "parallel"),
            vmem_limit_bytes=_vmem_limit_bytes(conv_need)),
    )(patches, w2, scale, shift)
    return out


class ConvolutionalEncoderPallas:
    """JAX/Pallas port of models/TDAVNet/encoder.py::ConvolutionalEncoder."""

    def __init__(self, in_chan, out_chan, kernel_size, stride, act_type=None,
                 norm_type="gLN", bias=False, layers=1, upsampling_depth=4, key=None,
                 tile_t=2048, force_two_pass=False, out_dtype=jnp.float32):
        assert act_type is None, "only act_type=None (identity) implemented"
        assert norm_type == "gLN"
        assert bias is False
        self.in_chan = in_chan
        self.out_chan = out_chan
        self.kernel_size = kernel_size
        self.stride = stride
        self.layers = layers
        self.upsampling_depth = upsampling_depth
        self.tile_t = tile_t
        self.force_two_pass = force_two_pass
        self.out_dtype = out_dtype

        g = math.gcd(kernel_size // 2, 2 ** upsampling_depth)
        self.lcm_1 = abs(out_chan // 2 * 2 ** upsampling_depth) // g
        self.lcm_2 = abs(kernel_size // 2 * 2 ** upsampling_depth) // g

        if key is None:
            key = jax.random.PRNGKey(0)
        self.params = []
        for i in range(layers):
            dilation = i + 1
            k = kernel_size * dilation
            key, wk = jax.random.split(key)
            # xavier_uniform_ for Conv1d weight (Cout, Cin, K)
            fan_in = in_chan * k
            fan_out = out_chan * k
            bound = math.sqrt(6.0 / (fan_in + fan_out))
            w = jax.random.uniform(wk, (out_chan, in_chan, k), jnp.float32, -bound, bound)
            gamma = jnp.ones((out_chan,), jnp.float32)   # gLN weight
            beta = jnp.zeros((out_chan,), jnp.float32)   # gLN bias
            self.params.append((w, gamma, beta, dilation))
        # TODO(synk): non-None act_type (e.g. ReLU/PReLU) from ConvNormAct not implemented.

    @staticmethod
    def _unsqueeze_to_3d(x):
        if x.ndim == 1:
            return x.reshape(1, 1, -1)
        elif x.ndim == 2:
            return x[:, None, :]
        return x

    @staticmethod
    def _pad(x, lcm):
        r = int(x.shape[-1]) % lcm
        if r:
            pad_widths = [(0, 0)] * (x.ndim - 1) + [(0, lcm - r)]
            return jnp.pad(x, pad_widths)
        return x

    def __call__(self, x):
        x = self._unsqueeze_to_3d(x)
        x = self._pad(x, self.lcm_1)
        x = self._pad(x, self.lcm_2)
        feature_maps = [
            conv_norm_act_pallas(x, w, g, b, self.stride, d,
                                 tile_t=self.tile_t,
                                 out_dtype=self.out_dtype,
                                 force_two_pass=self.force_two_pass)
            for (w, g, b, d) in self.params
        ]
        # torch.stack(feature_maps).sum(dim=0)
        # TODO(synk): fuse the per-layer kernels + this sum into one pallas_call for layers > 1.
        return functools.reduce(lambda a, b: a + b, feature_maps)


def _reference_forward(enc, x):
    """Pure-JAX reference (XLA conv + two-pass gLN) for correctness checking."""
    x3 = enc._unsqueeze_to_3d(x)
    xp = enc._pad(enc._pad(x3, enc.lcm_1), enc.lcm_2)
    outs = []
    for (w, g, b, d) in enc.params:
        K = w.shape[-1]
        pad = ((K - 1) // 2) * d
        y = jax.lax.conv_general_dilated(
            xp, w, window_strides=(enc.stride,), padding=[(pad, pad)],
            rhs_dilation=(d,), dimension_numbers=("NCH", "OIH", "NCH"))
        mean = jnp.mean(y, axis=(1, 2), keepdims=True)
        var = jnp.mean((y - mean) ** 2, axis=(1, 2), keepdims=True)
        yn = (y - mean) / jnp.sqrt(var + _EPS)
        outs.append(yn * g.reshape(1, -1, 1) + b.reshape(1, -1, 1))
    return functools.reduce(lambda a, b: a + b, outs)


if __name__ == "__main__":
    key = jax.random.PRNGKey(0)
    key, xk1, xk2, xk3, mk1, mk2, mk3 = jax.random.split(key, 7)

    # Config 1: fused single-pass path, multiple time tiles with a ragged last tile
    # (tile_t=384 -> TT=384, NT=3, T_rem=256 for T_out=1024).
    enc1 = ConvolutionalEncoderPallas(
        in_chan=1, out_chan=32, kernel_size=4, stride=2,
        act_type=None, norm_type="gLN", bias=False,
        layers=1, upsampling_depth=4, key=mk1, tile_t=384)
    x1 = jax.random.normal(xk1, (2, 1, 2000), jnp.float32)
    out1 = jax.block_until_ready(enc1(x1))
    ref1 = jax.block_until_ready(_reference_forward(enc1, x1))
    assert out1.shape == ref1.shape, (out1.shape, ref1.shape)
    err1 = float(jnp.max(jnp.abs(out1 - ref1)))
    assert jnp.allclose(out1, ref1, atol=2e-3, rtol=2e-3), err1

    # Config 2: raw 1-D waveform (exercises unsqueeze_to_3D and a single ragged tile:
    # T_out=192 is not a multiple of 128).
    enc2 = ConvolutionalEncoderPallas(
        in_chan=1, out_chan=32, kernel_size=4, stride=2,
        act_type=None, norm_type="gLN", bias=False,
        layers=1, upsampling_depth=4, key=mk2)
    x2 = jax.random.normal(xk2, (300,), jnp.float32)
    out2 = jax.block_until_ready(enc2(x2))
    ref2 = jax.block_until_ready(_reference_forward(enc2, x2))
    assert out2.shape == ref2.shape, (out2.shape, ref2.shape)
    err2 = float(jnp.max(jnp.abs(out2 - ref2)))
    assert jnp.allclose(out2, ref2, atol=2e-3, rtol=2e-3), err2

    # Config 3: forced two-pass fallback (used for very long clips) with a ragged
    # last output block (T_out=1536, TT=640 -> NT=3, masked partial writeback).
    enc3 = ConvolutionalEncoderPallas(
        in_chan=1, out_chan=32, kernel_size=4, stride=2,
        act_type=None, norm_type="gLN", bias=False,
        layers=1, upsampling_depth=4, key=mk3, tile_t=640, force_two_pass=True)
    x3 = jax.random.normal(xk3, (1, 1, 3000), jnp.float32)
    out3 = jax.block_until_ready(enc3(x3))
    ref3 = jax.block_until_ready(_reference_forward(enc3, x3))
    assert out3.shape == ref3.shape, (out3.shape, ref3.shape)
    err3 = float(jnp.max(jnp.abs(out3 - ref3)))
    assert jnp.allclose(out3, ref3, atol=2e-3, rtol=2e-3), err3

    print("KERNEL_OK")
</pallas_src>

<mosaic_0001>
module attributes {stable_mosaic.version = 11 : i64} {
  func.func @_fused_conv_gln_kernel(%arg0: i32, %arg1: i32, %arg2: memref<1x4x384xf32, #tpu.memory_space<vmem>>, %arg3: memref<32x4xf32, #tpu.memory_space<vmem>>, %arg4: memref<32x1xf32, #tpu.memory_space<vmem>>, %arg5: memref<32x1xf32, #tpu.memory_space<vmem>>, %arg6: memref<1x32x1024xf32, #tpu.memory_space<vmem>>, %arg7: memref<4x1xf32, #tpu.memory_space<vmem>>, %arg8: memref<4x4xf32, #tpu.memory_space<vmem>>) attributes {dimension_semantics = [#tpu.dimension_semantics<parallel>, #tpu.dimension_semantics<arbitrary>], iteration_bounds = array<i64: 2, 3>, scalar_prefetch = 0 : i64, scratch_operands = 2 : i64, tpu.core_type = #tpu.core_type<tc>, window_params = [{transform_indices = @transform_0, window_bounds = array<i64: 1, 4, 384>}, {pipeline_mode = #tpu.pipeline_mode<synchronous>, transform_indices = @transform_1, window_bounds = array<i64: 32, 4>}, {pipeline_mode = #tpu.pipeline_mode<synchronous>, transform_indices = @transform_2, window_bounds = array<i64: 32, 1>}, {pipeline_mode = #tpu.pipeline_mode<synchronous>, transform_indices = @transform_3, window_bounds = array<i64: 32, 1>}, {transform_indices = @transform_4, window_bounds = array<i64: 1, 32, 1024>}]} {
    %c0_i32 = arith.constant 0 : i32
    %0 = arith.cmpi eq, %arg1, %c0_i32 : i32
    %1 = arith.extui %0 : i1 to i32
    %c0_i32_0 = arith.constant 0 : i32
    %2 = arith.cmpi ne, %1, %c0_i32_0 : i32
    scf.if %2 {
      %cst_18 = arith.constant 0.000000e+00 : f32
      %22 = vector.broadcast %cst_18 : f32 to vector<4x1xf32>
      %c0_19 = arith.constant 0 : index
      %c0_20 = arith.constant 0 : index
      %23 = vector.load %arg7[%c0_19, %c0_20] : memref<4x1xf32, #tpu.memory_space<vmem>>, vector<4x1xf32>
      tpu.vector_store %arg7[%c0_19, %c0_20], %22 {strides = array<i32>} : memref<4x1xf32, #tpu.memory_space<vmem>>, vector<4x1xf32>,
      %cst_21 = arith.constant 0.000000e+00 : f32
      %24 = vector.broadcast %cst_21 : f32 to vector<4x4xf32>
      %c0_22 = arith.constant 0 : index
      %c0_23 = arith.constant 0 : index
      %25 = vector.load %arg8[%c0_22, %c0_23] : memref<4x4xf32, #tpu.memory_space<vmem>>, vector<4x4xf32>
      tpu.vector_store %arg8[%c0_22, %c0_23], %24 {strides = array<i32>} : memref<4x4xf32, #tpu.memory_space<vmem>>, vector<4x4xf32>,
    } else {
    }
    %c0 = arith.constant 0 : index
    %c0_1 = arith.constant 0 : index
    %c0_2 = arith.constant 0 : index
    %3 = vector.load %arg2[%c0, %c0_1, %c0_2] : memref<1x4x384xf32, #tpu.memory_space<vmem>>, vector<1x4x384xf32>
    %4 = vector.shape_cast %3 : vector<1x4x384xf32> to vector<4x384xf32>
    %c0_3 = arith.constant 0 : index
    %c0_4 = arith.constant 0 : index
    %5 = vector.load %arg3[%c0_3, %c0_4] : memref<32x4xf32, #tpu.memory_space<vmem>>, vector<32x4xf32>
    %c0_5 = arith.constant 0 : index
    %c0_6 = arith.constant 0 : index
    %6 = vector.load %arg7[%c0_5, %c0_6] : memref<4x1xf32, #tpu.memory_space<vmem>>, vector<4x1xf32>
    %cst = arith.constant dense<0.000000e+00> : vector<4xf32>
    %7 = vector.multi_reduction <add>, %4, %cst [1] : vector<4x384xf32> to vector<4xf32>
    %8 = vector.shape_cast %7 : vector<4xf32> to vector<4x1xf32>
    %9 = arith.addf %6, %8 : vector<4x1xf32>
    %c0_7 = arith.constant 0 : index
    %c0_8 = arith.constant 0 : index
    %10 = vector.load %arg7[%c0_7, %c0_8] : memref<4x1xf32, #tpu.memory_space<vmem>>, vector<4x1xf32>
    tpu.vector_store %arg7[%c0_7, %c0_8], %9 {strides = array<i32>} : memref<4x1xf32, #tpu.memory_space<vmem>>, vector<4x1xf32>,
    %c0_9 = arith.constant 0 : index
    %c0_10 = arith.constant 0 : index
    %11 = vector.load %arg8[%c0_9, %c0_10] : memref<4x4xf32, #tpu.memory_space<vmem>>, vector<4x4xf32>
    %cst_11 = arith.constant dense<0.000000e+00> : vector<4x4xf32>
    %12 = tpu.matmul %4, %4, %cst_11 {dimension_numbers = #tpu.dot_dimension_numbers<[1], [1], [0], [0], [0, 0, 1, 0], [], []>} : vector<4x384xf32>, vector<4x384xf32>, vector<4x4xf32> -> vector<4x4xf32>
    %13 = arith.addf %11, %12 : vector<4x4xf32>
    %c0_12 = arith.constant 0 : index
    %c0_13 = arith.constant 0 : index
    %14 = vector.load %arg8[%c0_12, %c0_13] : memref<4x4xf32, #tpu.memory_space<vmem>>, vector<4x4xf32>
    tpu.vector_store %arg8[%c0_12, %c0_13], %13 {strides = array<i32>} : memref<4x4xf32, #tpu.memory_space<vmem>>, vector<4x4xf32>,
    %cst_14 = arith.constant dense<0.000000e+00> : vector<32x384xf32>
    %15 = tpu.matmul %5, %4, %cst_14 {dimension_numbers = #tpu.dot_dimension_numbers<[1], [0], [0], [1], [0, 0, 1, 1], [], []>} : vector<32x4xf32>, vector<4x384xf32>, vector<32x384xf32> -> vector<32x384xf32>
    %c2_i32 = arith.constant 2 : i32
    %16 = arith.cmpi slt, %arg1, %c2_i32 : i32
    %17 = arith.extui %16 : i1 to i32
    %c0_i32_15 = arith.constant 0 : i32
    %18 = arith.cmpi ne, %17, %c0_i32_15 : i32
    scf.if %18 {
      %c384_i32 = arith.constant 384 : i32
      %22 = arith.muli %arg1, %c384_i32 : i32
      %23 = tpu.assume_multiple %22, 128 : i32
      %c0_18 = arith.constant 0 : index
      %c0_19 = arith.constant 0 : index
      %24 = arith.index_cast %23 : i32 to index
      %25 = vector.load %arg6[%c0_18, %c0_19, %24] : memref<1x32x1024xf32, #tpu.memory_space<vmem>>, vector<1x32x384xf32>
      %26 = vector.shape_cast %25 : vector<1x32x384xf32> to vector<32x384xf32>
      %27 = vector.shape_cast %15 : vector<32x384xf32> to vector<1x32x384xf32>
      tpu.vector_store %arg6[%c0_18, %c0_19, %24], %27 {strides = array<i32>} : memref<1x32x1024xf32, #tpu.memory_space<vmem>>, vector<1x32x384xf32>,
    } else {
    }
    %c2_i32_16 = arith.constant 2 : i32
    %19 = arith.cmpi eq, %arg1, %c2_i32_16 : i32
    %20 = arith.extui %19 : i1 to i32
    %c0_i32_17 = arith.constant 0 : i32
    %21 = arith.cmpi ne, %20, %c0_i32_17 : i32
    scf.if %21 {
      %22 = vector.extract_strided_slice %15 {offsets = [0, 0], sizes = [32, 256], strides = [1, 1]} : vector<32x384xf32> to vector<32x256xf32>
      %c0_18 = arith.constant 0 : index
      %c0_19 = arith.constant 0 : index
      %c768 = arith.constant 768 : index
      %23 = vector.load %arg6[%c0_18, %c0_19, %c768] : memref<1x32x1024xf32, #tpu.memory_space<vmem>>, vector<1x32x256xf32>
      %24 = vector.shape_cast %23 : vector<1x32x256xf32> to vector<32x256xf32>
      %25 = vector.shape_cast %22 : vector<32x256xf32> to vector<1x32x256xf32>
      tpu.vector_store %arg6[%c0_18, %c0_19, %c768], %25 {strides = array<i32>} : memref<1x32x1024xf32, #tpu.memory_space<vmem>>, vector<1x32x256xf32>,
      %c0_20 = arith.constant 0 : index
      %c0_21 = arith.constant 0 : index
      %26 = vector.load %arg7[%c0_20, %c0_21] : memref<4x1xf32, #tpu.memory_space<vmem>>, vector<4x1xf32>
      %cst_22 = arith.constant dense<0.000000e+00> : vector<32x1xf32>
      %27 = tpu.matmul %5, %26, %cst_22 {dimension_numbers = #tpu.dot_dimension_numbers<[1], [0], [0], [1], [0, 0, 1, 1], [], []>} : vector<32x4xf32>, vector<4x1xf32>, vector<32x1xf32> -> vector<32x1xf32>
      %28 = vector.shape_cast %27 : vector<32x1xf32> to vector<1x32x1xf32>
      %cst_23 = arith.constant dense<0.000000e+00> : vector<1xf32>
      %29 = vector.multi_reduction <add>, %28, %cst_23 [1, 2] : vector<1x32x1xf32> to vector<1xf32>
      %30 = vector.shape_cast %29 : vector<1xf32> to vector<1x1x1xf32>
      %31 = vector.extract %30[0, 0, 0] : f32 from vector<1x1x1xf32>
      %c0_24 = arith.constant 0 : index
      %c0_25 = arith.constant 0 : index
      %32 = vector.load %arg8[%c0_24, %c0_25] : memref<4x4xf32, #tpu.memory_space<vmem>>, vector<4x4xf32>
      %cst_26 = arith.constant dense<0.000000e+00> : vector<32x4xf32>
      %33 = tpu.matmul %5, %32, %cst_26 {dimension_numbers = #tpu.dot_dimension_numbers<[1], [0], [0], [1], [0, 0, 1, 1], [], []>} : vector<32x4xf32>, vector<4x4xf32>, vector<32x4xf32> -> vector<32x4xf32>
      %34 = arith.mulf %33, %5 : vector<32x4xf32>
      %35 = vector.shape_cast %34 : vector<32x4xf32> to vector<1x32x4xf32>
      %cst_27 = arith.constant dense<0.000000e+00> : vector<1xf32>
      %36 = vector.multi_reduction <add>, %35, %cst_27 [1, 2] : vector<1x32x4xf32> to vector<1xf32>
      %37 = vector.shape_cast %36 : vector<1xf32> to vector<1x1x1xf32>
      %38 = vector.extract %37[0, 0, 0] : f32 from vector<1x1x1xf32>
      %cst_28 = arith.constant 3.05175781E-5 : f32
      %39 = arith.mulf %31, %cst_28 : f32
      %cst_29 = arith.constant 3.05175781E-5 : f32
      %40 = arith.mulf %38, %cst_29 : f32
      %41 = arith.mulf %39, %39 : f32
      %42 = arith.subf %40, %41 : f32
      %cst_30 = arith.constant 0.000000e+00 : f32
      %43 = arith.maximumf %42, %cst_30 : f32
      %cst_31 = arith.constant 9.99999993E-9 : f32
      %44 = arith.addf %43, %cst_31 : f32
      %45 = math.rsqrt %44 : f32
      %c0_32 = arith.constant 0 : index
      %c0_33 = arith.constant 0 : index
      %46 = vector.load %arg4[%c0_32, %c0_33] : memref<32x1xf32, #tpu.memory_space<vmem>>, vector<32x1xf32>
      %47 = vector.broadcast %45 : f32 to vector<32x1xf32>
      %48 = arith.mulf %46, %47 : vector<32x1xf32>
      %c0_34 = arith.constant 0 : index
      %c0_35 = arith.constant 0 : index
      %49 = vector.load %arg5[%c0_34, %c0_35] : memref<32x1xf32, #tpu.memory_space<vmem>>, vector<32x1xf32>
      %50 = vector.broadcast %39 : f32 to vector<32x1xf32>
      %51 = arith.mulf %50, %48 : vector<32x1xf32>
      %52 = arith.subf %49, %51 : vector<32x1xf32>
      %c0_36 = arith.constant 0 : index
      %c0_37 = arith.constant 0 : index
      %c0_38 = arith.constant 0 : index
      %53 = vector.load %arg6[%c0_36, %c0_37, %c0_38] : memref<1x32x1024xf32, #tpu.memory_space<vmem>>, vector<1x32x1024xf32>
      %54 = vector.shape_cast %53 : vector<1x32x1024xf32> to vector<32x1024xf32>
      %55 = vector.broadcast %48 : vector<32x1xf32> to vector<32x1024xf32>
      %56 = arith.mulf %54, %55 : vector<32x1024xf32>
      %57 = vector.broadcast %52 : vector<32x1xf32> to vector<32x1024xf32>
      %58 = arith.addf %56, %57 : vector<32x1024xf32>
      %c0_39 = arith.constant 0 : index
      %c0_40 = arith.constant 0 : index
      %c0_41 = arith.constant 0 : index
      %59 = vector.load %arg6[%c0_39, %c0_40, %c0_41] : memref<1x32x1024xf32, #tpu.memory_space<vmem>>, vector<1x32x1024xf32>
      %60 = vector.shape_cast %59 : vector<1x32x1024xf32> to vector<32x1024xf32>
      %61 = vector.shape_cast %58 : vector<32x1024xf32> to vector<1x32x1024xf32>
      tpu.vector_store %arg6[%c0_39, %c0_40, %c0_41], %61 {strides = array<i32>} : memref<1x32x1024xf32, #tpu.memory_space<vmem>>, vector<1x32x1024xf32>,
    } else {
    }
    return
  }
  func.func @transform_0(%arg0: i32, %arg1: i32) -> (i32, i32, i32) {
    %c0_i32 = arith.constant 0 : i32
    %c0_i32_0 = arith.constant 0 : i32
    return %arg0, %c0_i32, %arg1 : i32, i32, i32
  }
  func.func @transform_1(%arg0: i32, %arg1: i32) -> (i32, i32) {
    %c0_i32 = arith.constant 0 : i32
    %c0_i32_0 = arith.constant 0 : i32
    %c0_i32_1 = arith.constant 0 : i32
    return %c0_i32, %c0_i32_0 : i32, i32
  }
  func.func @transform_2(%arg0: i32, %arg1: i32) -> (i32, i32) {
    %c0_i32 = arith.constant 0 : i32
    %c0_i32_0 = arith.constant 0 : i32
    %c0_i32_1 = arith.constant 0 : i32
    return %c0_i32, %c0_i32_0 : i32, i32
  }
  func.func @transform_3(%arg0: i32, %arg1: i32) -> (i32, i32) {
    %c0_i32 = arith.constant 0 : i32
    %c0_i32_0 = arith.constant 0 : i32
    %c0_i32_1 = arith.constant 0 : i32
    return %c0_i32, %c0_i32_0 : i32, i32
  }
  func.func @transform_4(%arg0: i32, %arg1: i32) -> (i32, i32, i32) {
    %c0_i32 = arith.constant 0 : i32
    %c0_i32_0 = arith.constant 0 : i32
    %c0_i32_1 = arith.constant 0 : i32
    return %arg0, %c0_i32, %c0_i32_0 : i32, i32, i32
  }
}

</mosaic_0001>

<llo_original>
// kernel: tpu_custom_call.1
$region0: #{tpu_custom_call.1}
  #allocation0 [shape = 'u32[]', space=smem, size = 0x4, offset = 0x4, fixed_abs, tag = 'smem constant byte address 0x4 - core index']
  #allocation1 [shape = 'u32[144,128]{1,0:T(1,128)}', space=vmem, size = 0x12000, scoped, tag = 'internal scratch']
  #allocation2 [shape = 'f32[4,1]{1,0:T(4,128)}', space=vmem, size = 0x800, scoped, tag = 'scratch operand']
  #allocation3 [shape = 'f32[4,4]{1,0:T(4,128)}', space=vmem, size = 0x800, scoped, tag = 'scratch operand']
  %s0 = inlined_call_operand.vmem [shape: f32[2,4,1152], index: 0, kind: input, shape index: {}]
  %s1 = inlined_call_operand.vmem [shape: f32[32,4], index: 1, kind: input, shape index: {}]
  %s2 = inlined_call_operand.vmem [shape: f32[32,1], index: 2, kind: input, shape index: {}]
  %s3 = inlined_call_operand.vmem [shape: f32[32,1], index: 3, kind: input, shape index: {}]
  %s4 = inlined_call_operand.hbm [shape: f32[2,32,1024], index: 4, kind: output, shape index: {}]
  %s5 = sld [smem:[#allocation0]]
  $region61: #{tpu_custom_call.1} parent=0
    _
  %s7 = ssub.s32 1, %s5
  %s8 = scalar_select 0, %s7, %s5
  $region1: #{tpu_custom_call.1} parent=0
    #allocation4 [shape = 'u8[262144]{0}', space=vmem, size = 0x40000, scoped, tag = 'output window, operand 0']
    #allocation5 [shape = 's32[2]{0}', space=sflag, size = 0x8, scoped, tag = 'scoped memory for tpu_custom_call.1']
    %9 = vsyncpa [#allocation5], 0
    %s10 = scalar_lea.sflag [#allocation5], 1
    %11 = vsyncpa %s10, 0
    loop: start=0, step=1, limit=8
    $region2: #{tpu_custom_call.1} parent=1 // loop_pre_header
      _
    $region3: #{tpu_custom_call.1} parent=1 // loop_header
      %s13 = sphi 0, %s17
      %p14 = scmp.ge.s32.totalorder %s13, 8
      %s20 = sphi 0, %s32
      %s21 = sphi 0, %s28
      %s22 = sphi 0, %s20
      %s23 = sphi 0, %s21
      %s24 = sphi 0, %s22
      %s25 = sphi 0, %s23
      %s37 = sphi 0, %s39
      %s40 = sphi 0, %s37
      %s41 = sphi 0, %s40
      %s57 = sphi 0, %s41
      %s61 = sphi 0, %s61
      %s63 = sphi 0, %s61
      %s64 = sphi 0, %s63
      %s78 = sphi 0, %s64
      %s82 = sphi 0, %s82
      %s84 = sphi 0, %s82
      %s85 = sphi 0, %s84
      %s99 = sphi 0, %s85
      %s103 = sphi 0, %s103
      %s105 = sphi 0, %s103
      %s106 = sphi 0, %s105
      %s120 = sphi 0, %s106
      %s126 = sphi 0, %s128
      %s129 = sphi 0, %s126
      %s130 = sphi 0, %s129
      %s146 = sphi 0, %s130
    $region4: #{tpu_custom_call.1} parent=1 // loop_header_branch
      %16 = sbr.rel (%p14) target = $region8
    $region5: #{tpu_custom_call.1} parent=1 // loop_body
      %s18 = ssub.s32 %s13, 1
      %s19 = ssub.s32 %s13, 2
      %s26 = sadd.s32 1, %s21
      %p27 = scmp.ge.s32.totalorder %s26, 3
      %s28 = scalar_select %p27, 0, %s26
      %s29 = sadd.s32 1, %s20
      %s30 = scalar_select %p27, %s29, %s20
      %p31 = scmp.ge.s32.totalorder %s30, 2
      %s32 = scalar_select %p31, 0, %s30
      %s33 = ssub.s32 %s20, %s32
      %s34 = ssub.s32 %s21, %s28
      %s35 = sor.u32 %s33, %s34
      %p36 = scmp.eq.s32.totalorder %s35, 0
      %s38 = sadd.s32 %s37, 1
      %s39 = scalar_select %p36, %s37, %s38
      %p42 = pneg %p36
      %p43 = scmp.eq.s32.totalorder %s13, 5
      %p44 = por %p42, %p43
      %p45 = scmp.ne.s32.totalorder %s37, %s40
      %p46 = scmp.eq.s32.totalorder %s13, 0
      %p47 = por %p45, %p46
      %p48 = scmp.ne.s32.totalorder %s37, %s40
      %p49 = scmp.eq.s32.totalorder %s18, 5
      %p50 = por %p48, %p49
      %p51 = scmp.ne.s32.totalorder %s40, %s41
      %p52 = scmp.eq.s32.totalorder %s18, 0
      %p53 = por %p51, %p52
      %p54 = scmp.ne.s32.totalorder %s40, %s41
      %p55 = scmp.eq.s32.totalorder %s19, 5
      %p56 = por %p54, %p55
      %p58 = scmp.ne.s32.totalorder %s41, %s57
      %p59 = scmp.eq.s32.totalorder %s19, 0
      %p60 = por %p58, %p59
      %s62 = sadd.s32 %s61, 1
      %p65 = scmp.eq.s32.totalorder %s13, 5
      %p66 = scmp.ne.s32.totalorder %s61, %s63
      %p67 = scmp.eq.s32.totalorder %s13, 0
      %p68 = por %p66, %p67
      %p69 = scmp.ne.s32.totalorder %s61, %s63
      %p70 = scmp.eq.s32.totalorder %s18, 5
      %p71 = por %p69, %p70
      %p72 = scmp.ne.s32.totalorder %s63, %s64
      %p73 = scmp.eq.s32.totalorder %s18, 0
      %p74 = por %p72, %p73
      %p75 = scmp.ne.s32.totalorder %s63, %s64
      %p76 = scmp.eq.s32.totalorder %s19, 5
      %p77 = por %p75, %p76
      %p79 = scmp.ne.s32.totalorder %s64, %s78
      %p80 = scmp.eq.s32.totalorder %s19, 0
      %p81 = por %p79, %p80
      %s83 = sadd.s32 %s82, 1
      %p86 = scmp.eq.s32.totalorder %s13, 5
      %p87 = scmp.ne.s32.totalorder %s82, %s84
      %p88 = scmp.eq.s32.totalorder %s13, 0
      %p89 = por %p87, %p88
      %p90 = scmp.ne.s32.totalorder %s82, %s84
      %p91 = scmp.eq.s32.totalorder %s18, 5
      %p92 = por %p90, %p91
      %p93 = scmp.ne.s32.totalorder %s84, %s85
      %p94 = scmp.eq.s32.totalorder %s18, 0
      %p95 = por %p93, %p94
      %p96 = scmp.ne.s32.totalorder %s84, %s85
      %p97 = scmp.eq.s32.totalorder %s19, 5
      %p98 = por %p96, %p97
      %p100 = scmp.ne.s32.totalorder %s85, %s99
      %p101 = scmp.eq.s32.totalorder %s19, 0
      %p102 = por %p100, %p101
      %s104 = sadd.s32 %s103, 1
      %p107 = scmp.eq.s32.totalorder %s13, 5
      %p108 = scmp.ne.s32.totalorder %s103, %s105
      %p109 = scmp.eq.s32.totalorder %s13, 0
      %p110 = por %p108, %p109
      %p111 = scmp.ne.s32.totalorder %s103, %s105
      %p112 = scmp.eq.s32.totalorder %s18, 5
      %p113 = por %p111, %p112
      %p114 = scmp.ne.s32.totalorder %s105, %s106
      %p115 = scmp.eq.s32.totalorder %s18, 0
      %p116 = por %p114, %p115
      %p117 = scmp.ne.s32.totalorder %s105, %s106
      %p118 = scmp.eq.s32.totalorder %s19, 5
      %p119 = por %p117, %p118
      %p121 = scmp.ne.s32.totalorder %s106, %s120
      %p122 = scmp.eq.s32.totalorder %s19, 0
      %p123 = por %p121, %p122
      %s124 = ssub.s32 %s20, %s32
      %p125 = scmp.eq.s32.totalorder %s124, 0
      %s127 = sadd.s32 %s126, 1
      %s128 = scalar_select %p125, %s126, %s127
      %p131 = pneg %p125
      %p132 = scmp.eq.s32.totalorder %s13, 5
      %p133 = por %p131, %p132
      %p134 = scmp.ne.s32.totalorder %s126, %s129
      %p135 = scmp.eq.s32.totalorder %s13, 0
      %p136 = por %p134, %p135
      %p137 = scmp.ne.s32.totalorder %s126, %s129
      %p138 = scmp.eq.s32.totalorder %s18, 5
      %p139 = por %p137, %p138
      %p140 = scmp.ne.s32.totalorder %s129, %s130
      %p141 = scmp.eq.s32.totalorder %s18, 0
      %p142 = por %p140, %p141
      %p143 = scmp.ne.s32.totalorder %s129, %s130
      %p144 = scmp.eq.s32.totalorder %s19, 5
      %p145 = por %p143, %p144
      %p147 = scmp.ne.s32.totalorder %s130, %s146
      %p148 = scmp.eq.s32.totalorder %s19, 0
      %p149 = por %p147, %p148
      %p150 = scmp.le.s32.totalorder 1, %s13
      %p151 = scmp.lt.s32.totalorder %s13, 7
      %p152 = pnand %p150, %p151
      %p153 = pneg %p152
      // Predicated region
      $region9: #{tpu_custom_call.1} parent=5 // pred_check
        _
      $region10: #{tpu_custom_call.1} parent=5 // pred_check_branch
        %155 = sbr.rel (%p152) target = $region12
      $region11: #{tpu_custom_call.1} parent=5 // pred_region
        %s156 = ssub.s32 %s13, 1
        // Predicated region
        $region13: #{tpu_custom_call.1} parent=11 // pred_check
          %p157 = pneg %p74
        $region14: #{tpu_custom_call.1} parent=11 // pred_check_branch
          %159 = sbr.rel (%p157) target = $region16
        $region15: #{tpu_custom_call.1} parent=11 // pred_region
          _
        $region16: #{tpu_custom_call.1} parent=11 // pred_fallthru
          _
        // Predicated region
        $region17: #{tpu_custom_call.1} parent=11 // pred_check
          %p160 = pneg %p95
        $region18: #{tpu_custom_call.1} parent=11 // pred_check_branch
          %162 = sbr.rel (%p160) target = $region20
        $region19: #{tpu_custom_call.1} parent=11 // pred_region
          _
        $region20: #{tpu_custom_call.1} parent=11 // pred_fallthru
          _
        // Predicated region
        $region21: #{tpu_custom_call.1} parent=11 // pred_check
          %p163 = pneg %p116
        $region22: #{tpu_custom_call.1} parent=11 // pred_check_branch
          %165 = sbr.rel (%p163) target = $region24
        $region23: #{tpu_custom_call.1} parent=11 // pred_region
          _
        $region24: #{tpu_custom_call.1} parent=11 // pred_fallthru
          _
      $region12: #{tpu_custom_call.1} parent=5 // pred_fallthru
        _
      %p166 = scmp.lt.s32.totalorder %s13, 6
      // Predicated region
      $region25: #{tpu_custom_call.1} parent=5 // pred_check
        %p167 = pneg %p166
      $region26: #{tpu_custom_call.1} parent=5 // pred_check_branch
        %169 = sbr.rel (%p167) target = $region28
      $region27: #{tpu_custom_call.1} parent=5 // pred_region
        // Predicated region
        $region29: #{tpu_custom_call.1} parent=27 // pred_check
          %p170 = pneg %p47
        $region30: #{tpu_custom_call.1} parent=27 // pred_check_branch
          %172 = sbr.rel (%p170) target = $region32
        $region31: #{tpu_custom_call.1} parent=27 // pred_region
          %s173 = smul.u32 3, %s21
          %p174 = scmp.lt.s32.totalorder %s20, 1
          %s175 = scalar_select %p174, %s20, 1
          %p176 = scmp.lt.s32.totalorder %s173, 8
          %s177 = scalar_select %p176, %s173, 8
          %s178 = smul.addr %s175, 9
          %s179 = sadd.s32 %s177, %s178
          %s180 = smul.addr %s179, 4
          %s181 = scalar_lea.vmem %s0, %s180
          %s182 = smul.u32 3, %s21
        $region32: #{tpu_custom_call.1} parent=27 // pred_fallthru
          _
      $region28: #{tpu_custom_call.1} parent=5 // pred_fallthru
        _
      %p183 = scmp.le.s32.totalorder 1, %s13
      %p184 = scmp.lt.s32.totalorder %s13, 7
      %p185 = pnand %p183, %p184
      %p186 = pneg %p185
      // Predicated region
      $region33: #{tpu_custom_call.1} parent=5 // pred_check
        _
      $region34: #{tpu_custom_call.1} parent=5 // pred_check_branch
        %188 = sbr.rel (%p185) target = $region36
      $region35: #{tpu_custom_call.1} parent=5 // pred_region
        %s189 = ssub.s32 %s13, 1
        %s190 = smul.u32 3, %s23
        %p191 = scmp.lt.s32.totalorder %s22, 1
        %s192 = scalar_select %p191, %s22, 1
        %p193 = scmp.lt.s32.totalorder %s190, 8
        %s194 = scalar_select %p193, %s190, 8
        %s195 = smul.addr %s192, 9
        %s196 = sadd.s32 %s194, %s195
        %s197 = smul.addr %s196, 4
        %s198 = scalar_lea.vmem %s0, %s197
        %p199 = pneg %p53
        %p200 = pneg %p50
        %p201 = pneg %p74
        %p202 = pneg %p71
        %p203 = pneg %p95
        %p204 = pneg %p92
        %p205 = pneg %p116
        %p206 = pneg %p113
        %p207 = pneg %p142
        %p208 = pneg %p139
        %s209 = sand.u32 %s129, 1
        %s210 = scalar_lea.sflag [#allocation5], %s209
        %s211 = sand.u32 %s129, 1
        %s212 = smul.addr %s211, 256
        %s213 = scalar_lea.vmem [#allocation4], %s212
        %s214 = smul.u32 3, %s23
        %p215 = scmp.lt.s32.totalorder %s22, 1
        %s216 = scalar_select %p215, %s22, 1
        %p217 = scmp.lt.s32.totalorder %s214, 8
        %s218 = scalar_select %p217, %s214, 8
        %s219 = smul.addr %s216, 9
        %s220 = sadd.s32 %s218, %s219
        %s221 = smul.addr %s220, 4
        %s222 = scalar_lea.vmem %s0, %s221
        %s223 = smul.u32 3, %s23
        %p224 = scmp.eq.s32.totalorder %s23, 0
        // Predicated region
        $region37: #{tpu_custom_call.1} parent=35 // pred_check
          %p225 = pneg %p224
        $region38: #{tpu_custom_call.1} parent=35 // pred_check_branch
          %227 = sbr.rel (%p225) target = $region40
        $region39: #{tpu_custom_call.1} parent=35 // pred_region
          %vm228 = vcmask 3072
          %229 = vst.msk [vmem:[#allocation2] sm:$0xf] %vm228, 0.0
          %vm230 = vcmask 27648
          %231 = vst.msk [vmem:[#allocation3] sm:$0xf] %vm230, 0.0
        $region40: #{tpu_custom_call.1} parent=35 // pred_fallthru
          _
        %v232 = vld [vmem:[%s222] sm:$0xff]
        %v233 = vld [vmem:[%s222 + $0x8] sm:$0xf]
        %v234 = vld [vmem:[%s1] sm:$0xff]
        %v235 = vld [vmem:[%s1 + $0x8] sm:$0xff]
        %v236 = vld [vmem:[%s1 + $0x10] sm:$0xff]
        %v237 = vld [vmem:[%s1 + $0x18] sm:$0xff]
        %v238 = vld [vmem:[#allocation2] sm:$0xf]
        %v241 = vcombine.high %v232, %v232
        %vm243 = vcmask 1043456
        %v244 = vsel %vm243, %v232, 0.0
        %v245 = vsel %vm243, %v241, 0.0
        %v246 = vadd.f32 %v244, %v245
        %v247 = vsel %vm243, %v233, 0.0
        %v248 = vadd.f32 %v246, %v247
        %249 = vadd.xlane.f32.xlu0 %v248
        %v250 = vpop.xlane.xlu0 %249
        %v251 = vadd.f32 %v238, %v250
        %vm252 = vcmask 3072
        %253 = vst.msk [vmem:[#allocation2] sm:$0xf] %vm252, %v251
        %v254 = vld [vmem:[#allocation3] sm:$0xf]
        %255 = vmatprep.subr.mxu0 %v241
        %256 = vmatpush1.xpose.msra.mxu0 %v232
        %257 = vmatprep.subr.mxu0 0.0
        %258 = vmatpush1.xpose.msra.mxu0 0.0
        %259 = vmatprep.subr.mxu0 0.0
        %260 = vmatpush1.xpose.msra.mxu0 0.0
        %261 = vmatprep.subr.mxu0 0.0
        %262 = vmatpush1.xpose.msra.mxu0 0.0
        %263 = vmatprep.subr.mxu0 0.0
        %264 = vmatpush1.xpose.msra.mxu0 0.0
        %265 = vmatprep.subr.mxu0 0.0
        %266 = vmatpush1.xpose.msra.mxu0 0.0
        %267 = vmatprep.subr.mxu0 0.0
        %268 = vmatpush1.xpose.msra.mxu0 0.0
        %269 = vmatprep.subr.mxu0 0.0
        %270 = vmatpush1.xpose.msra.mxu0 0.0
        %271 = vmatprep.subr.mxu0 0.0
        %272 = vmatpush1.xpose.msra.mxu0 0.0
        %273 = vmatprep.subr.mxu0 0.0
        %274 = vmatpush1.xpose.msra.mxu0 0.0
        %275 = vmatprep.subr.mxu0 0.0
        %276 = vmatpush1.xpose.msra.mxu0 0.0
        %277 = vmatprep.subr.mxu0 0.0
        %278 = vmatpush1.xpose.msra.mxu0 0.0
        %279 = vmatprep.subr.mxu0 0.0
        %280 = vmatpush1.xpose.msra.mxu0 0.0
        %281 = vmatprep.subr.mxu0 0.0
        %282 = vmatpush1.xpose.msra.mxu0 0.0
        %283 = vmatprep.subr.mxu0 0.0
        %284 = vmatpush1.xpose.msra.mxu0 0.0
        %285 = vmatprep.subr.mxu0 0.0
        %286 = vmatpush1.xpose.msra.mxu0 0.0
        %287 = vmatprep.subr.mxu0 0.0
        %288 = vmatpush1.xpose.msra.mxu0 0.0
        %289 = vmatprep.subr.mxu0 0.0
        %290 = vmatpush1.xpose.msra.mxu0 0.0
        %291 = vmatprep.subr.mxu0 0.0
        %292 = vmatpush1.xpose.msra.mxu0 0.0
        %293 = vmatprep.subr.mxu0 0.0
        %294 = vmatpush1.xpose.msra.mxu0 0.0
        %295 = vmatprep.subr.mxu0 0.0
        %296 = vmatpush1.xpose.msra.mxu0 0.0
        %297 = vmatprep.subr.mxu0 0.0
        %298 = vmatpush1.xpose.msra.mxu0 0.0
        %299 = vmatprep.subr.mxu0 0.0
        %300 = vmatpush1.xpose.msra.mxu0 0.0
        %301 = vmatprep.subr.mxu0 0.0
        %302 = vmatpush1.xpose.msra.mxu0 0.0
        %303 = vmatprep.subr.mxu0 0.0
        %304 = vmatpush1.xpose.msra.mxu0 0.0
        %305 = vmatprep.subr.mxu0 0.0
        %306 = vmatpush1.xpose.msra.mxu0 0.0
        %307 = vmatprep.subr.mxu0 0.0
        %308 = vmatpush1.xpose.msra.mxu0 0.0
        %309 = vmatprep.subr.mxu0 0.0
        %310 = vmatpush1.xpose.msra.mxu0 0.0
        %311 = vmatprep.subr.mxu0 0.0
        %312 = vmatpush1.xpose.msra.mxu0 0.0
        %313 = vmatprep.subr.mxu0 0.0
        %314 = vmatpush1.xpose.msra.mxu0 0.0
        %315 = vmatprep.subr.mxu0 0.0
        %316 = vmatpush1.xpose.msra.mxu0 0.0
        %317 = vmatprep.subr.mxu0 0.0
        %318 = vmatpush1.xpose.msra.mxu0 0.0
        %319 = vmatprep.mubr.f32.mxu0 %v241
        %320 = vmatmul.mubr.f32.gmra.mrb[0].mxu0 %v232
        %v321 = vpop.f32.mrb[0].mxu0
        %v322 = vadd.f32 0.0, %v321
        %v323 = vpop.f32.mrb[0].mxu0
        %324 = vdwg.mxu0
        %325 = vmatprep.subr.mxu0 0.0
        %326 = vmatpush1.xpose.msra.mxu0 %v233
        %327 = vmatprep.subr.mxu0 0.0
        %328 = vmatpush1.xpose.msra.mxu0 0.0
        %329 = vmatprep.subr.mxu0 0.0
        %330 = vmatpush1.xpose.msra.mxu0 0.0
        %331 = vmatprep.subr.mxu0 0.0
        %332 = vmatpush1.xpose.msra.mxu0 0.0
        %333 = vmatprep.subr.mxu0 0.0
        %334 = vmatpush1.xpose.msra.mxu0 0.0
        %335 = vmatprep.subr.mxu0 0.0
        %336 = vmatpush1.xpose.msra.mxu0 0.0
        %337 = vmatprep.subr.mxu0 0.0
        %338 = vmatpush1.xpose.msra.mxu0 0.0
        %339 = vmatprep.subr.mxu0 0.0
        %340 = vmatpush1.xpose.msra.mxu0 0.0
        %341 = vmatprep.subr.mxu0 0.0
        %342 = vmatpush1.xpose.msra.mxu0 0.0
        %343 = vmatprep.subr.mxu0 0.0
        %344 = vmatpush1.xpose.msra.mxu0 0.0
        %345 = vmatprep.subr.mxu0 0.0
        %346 = vmatpush1.xpose.msra.mxu0 0.0
        %347 = vmatprep.subr.mxu0 0.0
        %348 = vmatpush1.xpose.msra.mxu0 0.0
        %349 = vmatprep.subr.mxu0 0.0
        %350 = vmatpush1.xpose.msra.mxu0 0.0
        %351 = vmatprep.subr.mxu0 0.0
        %352 = vmatpush1.xpose.msra.mxu0 0.0
        %353 = vmatprep.subr.mxu0 0.0
        %354 = vmatpush1.xpose.msra.mxu0 0.0
        %355 = vmatprep.subr.mxu0 0.0
        %356 = vmatpush1.xpose.msra.mxu0 0.0
        %357 = vmatprep.subr.mxu0 0.0
        %358 = vmatpush1.xpose.msra.mxu0 0.0
        %359 = vmatprep.subr.mxu0 0.0
        %360 = vmatpush1.xpose.msra.mxu0 0.0
        %361 = vmatprep.subr.mxu0 0.0
        %362 = vmatpush1.xpose.msra.mxu0 0.0
        %363 = vmatprep.subr.mxu0 0.0
        %364 = vmatpush1.xpose.msra.mxu0 0.0
        %365 = vmatprep.subr.mxu0 0.0
        %366 = vmatpush1.xpose.msra.mxu0 0.0
        %367 = vmatprep.subr.mxu0 0.0
        %368 = vmatpush1.xpose.msra.mxu0 0.0
        %369 = vmatprep.subr.mxu0 0.0
        %370 = vmatpush1.xpose.msra.mxu0 0.0
        %371 = vmatprep.subr.mxu0 0.0
        %372 = vmatpush1.xpose.msra.mxu0 0.0
        %373 = vmatprep.subr.mxu0 0.0
        %374 = vmatpush1.xpose.msra.mxu0 0.0
        %375 = vmatprep.subr.mxu0 0.0
        %376 = vmatpush1.xpose.msra.mxu0 0.0
        %377 = vmatprep.subr.mxu0 0.0
        %378 = vmatpush1.xpose.msra.mxu0 0.0
        %379 = vmatprep.subr.mxu0 0.0
        %380 = vmatpush1.xpose.msra.mxu0 0.0
        %381 = vmatprep.subr.mxu0 0.0
        %382 = vmatpush1.xpose.msra.mxu0 0.0
        %383 = vmatprep.subr.mxu0 0.0
        %384 = vmatpush1.xpose.msra.mxu0 0.0
        %385 = vmatprep.subr.mxu0 0.0
        %386 = vmatpush1.xpose.msra.mxu0 0.0
        %387 = vmatprep.subr.mxu0 0.0
        %388 = vmatpush1.xpose.msra.mxu0 0.0
        %389 = vmatprep.mubr.f32.mxu0 0.0
        %390 = vmatmul.mubr.f32.gmra.mrb[0].mxu0 %v233
        %v391 = vpop.f32.mrb[0].mxu0
        %v392 = vadd.f32 %v322, %v391
        %v393 = vpop.f32.mrb[0].mxu0
        %394 = vdwg.mxu0
        %v395 = vadd.f32 %v254, %v392
        %vm396 = vcmask 27648
        %397 = vst.msk [vmem:[#allocation3] sm:$0xf] %vm396, %v395
        %vm398 = vcmask 31744
        %v400 = vsel %vm398, %v234, 0
        %v403 = vsel %vm398, %v235, 0
        %v406 = vsel %vm398, %v236, 0
        %v409 = vsel %vm398, %v237, 0
        %v411 = vsel %vm243, %v232, 0
        %v413 = vsel %vm243, %v241, 0
        %v415 = vsel %vm243, %v233, 0
        %417 = vmatprep.subr.mxu0 %v413
        %418 = vmatpush1.msra.mxu0 %v411
        %419 = vmatprep.subr.mxu0 0.0
        %420 = vmatpush1.msra.mxu0 0.0
        %421 = vmatprep.subr.mxu0 0.0
        %422 = vmatpush1.msra.mxu0 0.0
        %423 = vmatprep.subr.mxu0 0.0
        %424 = vmatpush1.msra.mxu0 0.0
        %425 = vmatprep.subr.mxu0 0.0
        %426 = vmatpush1.msra.mxu0 0.0
        %427 = vmatprep.subr.mxu0 0.0
        %428 = vmatpush1.msra.mxu0 0.0
        %429 = vmatprep.subr.mxu0 0.0
        %430 = vmatpush1.msra.mxu0 0.0
        %431 = vmatprep.subr.mxu0 0.0
        %432 = vmatpush1.msra.mxu0 0.0
        %433 = vmatprep.subr.mxu0 0.0
        %434 = vmatpush1.msra.mxu0 0.0
        %435 = vmatprep.subr.mxu0 0.0
        %436 = vmatpush1.msra.mxu0 0.0
        %437 = vmatprep.subr.mxu0 0.0
        %438 = vmatpush1.msra.mxu0 0.0
        %439 = vmatprep.subr.mxu0 0.0
        %440 = vmatpush1.msra.mxu0 0.0
        %441 = vmatprep.subr.mxu0 0.0
        %442 = vmatpush1.msra.mxu0 0.0
        %443 = vmatprep.subr.mxu0 0.0
        %444 = vmatpush1.msra.mxu0 0.0
        %445 = vmatprep.subr.mxu0 0.0
        %446 = vmatpush1.msra.mxu0 0.0
        %447 = vmatprep.subr.mxu0 0.0
        %448 = vmatpush1.msra.mxu0 0.0
        %449 = vmatprep.subr.mxu0 0.0
        %450 = vmatpush1.msra.mxu0 0.0
        %451 = vmatprep.subr.mxu0 0.0
        %452 = vmatpush1.msra.mxu0 0.0
        %453 = vmatprep.subr.mxu0 0.0
        %454 = vmatpush1.msra.mxu0 0.0
        %455 = vmatprep.subr.mxu0 0.0
        %456 = vmatpush1.msra.mxu0 0.0
        %457 = vmatprep.subr.mxu0 0.0
        %458 = vmatpush1.msra.mxu0 0.0
        %459 = vmatprep.subr.mxu0 0.0
        %460 = vmatpush1.msra.mxu0 0.0
        %461 = vmatprep.subr.mxu0 0.0
        %462 = vmatpush1.msra.mxu0 0.0
        %463 = vmatprep.subr.mxu0 0.0
        %464 = vmatpush1.msra.mxu0 0.0
        %465 = vmatprep.subr.mxu0 0.0
        %466 = vmatpush1.msra.mxu0 0.0
        %467 = vmatprep.subr.mxu0 0.0
        %468 = vmatpush1.msra.mxu0 0.0
        %469 = vmatprep.subr.mxu0 0.0
        %470 = vmatpush1.msra.mxu0 0.0
        %471 = vmatprep.subr.mxu0 0.0
        %472 = vmatpush1.msra.mxu0 0.0
        %473 = vmatprep.subr.mxu0 0.0
        %474 = vmatpush1.msra.mxu0 0.0
        %475 = vmatprep.subr.mxu0 0.0
        %476 = vmatpush1.msra.mxu0 0.0
        %477 = vmatprep.subr.mxu0 0.0
        %478 = vmatpush1.msra.mxu0 0.0
        %479 = vmatprep.subr.mxu0 0.0
        %480 = vmatpush1.msra.mxu0 0.0
        %481 = vmatprep.mubr.f32.mxu0 0.0
        %482 = vmatmul.mubr.f32.gmra.mrb[0].mxu0 %v400
        %v483 = vpop.f32.mrb[0].mxu0
        %v484 = vadd.f32 0.0, %v483
        %v485 = vpop.f32.mrb[0].mxu0
        %v486 = vadd.f32 0.0, %v485
        %487 = vmatprep.mubr.f32.mxu0 0.0
        %488 = vmatmul.mubr.f32.gmra.mrb[0].mxu0 %v403
        %v489 = vpop.f32.mrb[0].mxu0
        %v490 = vadd.f32 0.0, %v489
        %v491 = vpop.f32.mrb[0].mxu0
        %v492 = vadd.f32 0.0, %v491
        %493 = vmatprep.mubr.f32.mxu0 0.0
        %494 = vmatmul.mubr.f32.gmra.mrb[0].mxu0 %v406
        %v495 = vpop.f32.mrb[0].mxu0
        %v496 = vadd.f32 0.0, %v495
        %v497 = vpop.f32.mrb[0].mxu0
        %v498 = vadd.f32 0.0, %v497
        %499 = vmatprep.mubr.f32.mxu0 0.0
        %500 = vmatmul.mubr.f32.gmra.mrb[0].mxu0 %v409
        %v501 = vpop.f32.mrb[0].mxu0
        %v502 = vadd.f32 0.0, %v501
        %v503 = vpop.f32.mrb[0].mxu0
        %v504 = vadd.f32 0.0, %v503
        %505 = vdwg.mxu0
        %506 = vmatprep.subr.mxu0 0.0
        %507 = vmatpush1.msra.mxu0 %v415
        %508 = vmatprep.subr.mxu0 0.0
        %509 = vmatpush1.msra.mxu0 0.0
        %510 = vmatprep.subr.mxu0 0.0
        %511 = vmatpush1.msra.mxu0 0.0
        %512 = vmatprep.subr.mxu0 0.0
        %513 = vmatpush1.msra.mxu0 0.0
        %514 = vmatprep.subr.mxu0 0.0
        %515 = vmatpush1.msra.mxu0 0.0
        %516 = vmatprep.subr.mxu0 0.0
        %517 = vmatpush1.msra.mxu0 0.0
        %518 = vmatprep.subr.mxu0 0.0
        %519 = vmatpush1.msra.mxu0 0.0
        %520 = vmatprep.subr.mxu0 0.0
        %521 = vmatpush1.msra.mxu0 0.0
        %522 = vmatprep.subr.mxu0 0.0
        %523 = vmatpush1.msra.mxu0 0.0
        %524 = vmatprep.subr.mxu0 0.0
        %525 = vmatpush1.msra.mxu0 0.0
        %526 = vmatprep.subr.mxu0 0.0
        %527 = vmatpush1.msra.mxu0 0.0
        %528 = vmatprep.subr.mxu0 0.0
        %529 = vmatpush1.msra.mxu0 0.0
        %530 = vmatprep.subr.mxu0 0.0
        %531 = vmatpush1.msra.mxu0 0.0
        %532 = vmatprep.subr.mxu0 0.0
        %533 = vmatpush1.msra.mxu0 0.0
        %534 = vmatprep.subr.mxu0 0.0
        %535 = vmatpush1.msra.mxu0 0.0
        %536 = vmatprep.subr.mxu0 0.0
        %537 = vmatpush1.msra.mxu0 0.0
        %538 = vmatprep.subr.mxu0 0.0
        %539 = vmatpush1.msra.mxu0 0.0
        %540 = vmatprep.subr.mxu0 0.0
        %541 = vmatpush1.msra.mxu0 0.0
        %542 = vmatprep.subr.mxu0 0.0
        %543 = vmatpush1.msra.mxu0 0.0
        %544 = vmatprep.subr.mxu0 0.0
        %545 = vmatpush1.msra.mxu0 0.0
        %546 = vmatprep.subr.mxu0 0.0
        %547 = vmatpush1.msra.mxu0 0.0
        %548 = vmatprep.subr.mxu0 0.0
        %549 = vmatpush1.msra.mxu0 0.0
        %550 = vmatprep.subr.mxu0 0.0
        %551 = vmatpush1.msra.mxu0 0.0
        %552 = vmatprep.subr.mxu0 0.0
        %553 = vmatpush1.msra.mxu0 0.0
        %554 = vmatprep.subr.mxu0 0.0
        %555 = vmatpush1.msra.mxu0 0.0
        %556 = vmatprep.subr.mxu0 0.0
        %557 = vmatpush1.msra.mxu0 0.0
        %558 = vmatprep.subr.mxu0 0.0
        %559 = vmatpush1.msra.mxu0 0.0
        %560 = vmatprep.subr.mxu0 0.0
        %561 = vmatpush1.msra.mxu0 0.0
        %562 = vmatprep.subr.mxu0 0.0
        %563 = vmatpush1.msra.mxu0 0.0
        %564 = vmatprep.subr.mxu0 0.0
        %565 = vmatpush1.msra.mxu0 0.0
        %566 = vmatprep.subr.mxu0 0.0
        %567 = vmatpush1.msra.mxu0 0.0
        %568 = vmatprep.subr.mxu0 0.0
        %569 = vmatpush1.msra.mxu0 0.0
        %570 = vmatprep.mubr.f32.mxu0 0.0
        %571 = vmatmul.mubr.f32.gmra.mrb[0].mxu0 %v400
        %v572 = vpop.f32.mrb[0].mxu0
        %v573 = vadd.f32 0.0, %v572
        %v574 = vpop.f32.mrb[0].mxu0
        %575 = vmatprep.mubr.f32.mxu0 0.0
        %576 = vmatmul.mubr.f32.gmra.mrb[0].mxu0 %v403
        %v577 = vpop.f32.mrb[0].mxu0
        %v578 = vadd.f32 0.0, %v577
        %v579 = vpop.f32.mrb[0].mxu0
        %580 = vmatprep.mubr.f32.mxu0 0.0
        %581 = vmatmul.mubr.f32.gmra.mrb[0].mxu0 %v406
        %v582 = vpop.f32.mrb[0].mxu0
        %v583 = vadd.f32 0.0, %v582
        %v584 = vpop.f32.mrb[0].mxu0
        %585 = vmatprep.mubr.f32.mxu0 0.0
        %586 = vmatmul.mubr.f32.gmra.mrb[0].mxu0 %v409
        %v587 = vpop.f32.mrb[0].mxu0
        %v588 = vadd.f32 0.0, %v587
        %v589 = vpop.f32.mrb[0].mxu0
        %590 = vdwg.mxu0
        %p591 = scmp.lt.s32.totalorder %s23, 2
        // Predicated region
        $region41: #{tpu_custom_call.1} parent=35 // pred_check
          %p592 = pneg %p591
        $region42: #{tpu_custom_call.1} parent=35 // pred_check_branch
          %594 = sbr.rel (%p592) target = $region44
        $region43: #{tpu_custom_call.1} parent=35 // pred_region
          %s595 = smul.u32 %s23, 384
          %s596 = sshra.s32 %s595, 7
          %s597 = sand.u32 %s595, 127
          %s598 = smul.addr %s596, 8
          %s599 = scalar_lea.vmem %s213, %s598 [#allocation4]
          %600 = vst [vmem:[%s599] sm:$0xff] %v484
          %601 = vst [vmem:[%s599 + $0x8] sm:$0xff] %v486
          %602 = vst [vmem:[%s599 + $0x10] sm:$0xff] %v573
          %603 = vst [vmem:[%s599 + $0x40] sm:$0xff] %v490
          %604 = vst [vmem:[%s599 + $0x48] sm:$0xff] %v492
          %605 = vst [vmem:[%s599 + $0x50] sm:$0xff] %v578
          %606 = vst [vmem:[%s599 + $0x80] sm:$0xff] %v496
          %607 = vst [vmem:[%s599 + $0x88] sm:$0xff] %v498
          %608 = vst [vmem:[%s599 + $0x90] sm:$0xff] %v583
          %609 = vst [vmem:[%s599 + $0xc0] sm:$0xff] %v502
          %610 = vst [vmem:[%s599 + $0xc8] sm:$0xff] %v504
          %611 = vst [vmem:[%s599 + $0xd0] sm:$0xff] %v588
        $region44: #{tpu_custom_call.1} parent=35 // pred_fallthru
          _
        %p612 = scmp.eq.s32.totalorder %s23, 2
        // Predicated region
        $region45: #{tpu_custom_call.1} parent=35 // pred_check
          %p613 = pneg %p612
        $region46: #{tpu_custom_call.1} parent=35 // pred_check_branch
          %615 = sbr.rel (%p613) target = $region48
        $region47: #{tpu_custom_call.1} parent=35 // pred_region
          %616 = vst [vmem:[%s213 + $0x30] sm:$0xff] %v484
          %617 = vst [vmem:[%s213 + $0x38] sm:$0xff] %v486
          %618 = vst [vmem:[%s213 + $0x70] sm:$0xff] %v490
          %619 = vst [vmem:[%s213 + $0x78] sm:$0xff] %v492
          %620 = vst [vmem:[%s213 + $0xb0] sm:$0xff] %v496
          %621 = vst [vmem:[%s213 + $0xb8] sm:$0xff] %v498
          %622 = vst [vmem:[%s213 + $0xf0] sm:$0xff] %v502
          %623 = vst [vmem:[%s213 + $0xf8] sm:$0xff] %v504
          %v624 = vld [vmem:[#allocation2] sm:$0xf]
          %v626 = vsel %vm243, %v624, 0
          %628 = vmatprep.subr.mxu0 0.0
          %629 = vmatpush1.msra.mxu0 %v626
          %630 = vmatprep.subr.mxu0 0.0
          %631 = vmatpush1.msra.mxu0 0.0
          %632 = vmatprep.subr.mxu0 0.0
          %633 = vmatpush1.msra.mxu0 0.0
          %634 = vmatprep.subr.mxu0 0.0
          %635 = vmatpush1.msra.mxu0 0.0
          %636 = vmatprep.subr.mxu0 0.0
          %637 = vmatpush1.msra.mxu0 0.0
          %638 = vmatprep.subr.mxu0 0.0
          %639 = vmatpush1.msra.mxu0 0.0
          %640 = vmatprep.subr.mxu0 0.0
          %641 = vmatpush1.msra.mxu0 0.0
          %642 = vmatprep.subr.mxu0 0.0
          %643 = vmatpush1.msra.mxu0 0.0
          %644 = vmatprep.subr.mxu0 0.0
          %645 = vmatpush1.msra.mxu0 0.0
          %646 = vmatprep.subr.mxu0 0.0
          %647 = vmatpush1.msra.mxu0 0.0
          %648 = vmatprep.subr.mxu0 0.0
          %649 = vmatpush1.msra.mxu0 0.0
          %650 = vmatprep.subr.mxu0 0.0
          %651 = vmatpush1.msra.mxu0 0.0
          %652 = vmatprep.subr.mxu0 0.0
          %653 = vmatpush1.msra.mxu0 0.0
          %654 = vmatprep.subr.mxu0 0.0
          %655 = vmatpush1.msra.mxu0 0.0
          %656 = vmatprep.subr.mxu0 0.0
          %657 = vmatpush1.msra.mxu0 0.0
          %658 = vmatprep.subr.mxu0 0.0
          %659 = vmatpush1.msra.mxu0 0.0
          %660 = vmatprep.subr.mxu0 0.0
          %661 = vmatpush1.msra.mxu0 0.0
          %662 = vmatprep.subr.mxu0 0.0
          %663 = vmatpush1.msra.mxu0 0.0
          %664 = vmatprep.subr.mxu0 0.0
          %665 = vmatpush1.msra.mxu0 0.0
          %666 = vmatprep.subr.mxu0 0.0
          %667 = vmatpush1.msra.mxu0 0.0
          %668 = vmatprep.subr.mxu0 0.0
          %669 = vmatpush1.msra.mxu0 0.0
          %670 = vmatprep.subr.mxu0 0.0
          %671 = vmatpush1.msra.mxu0 0.0
          %672 = vmatprep.subr.mxu0 0.0
          %673 = vmatpush1.msra.mxu0 0.0
          %674 = vmatprep.subr.mxu0 0.0
          %675 = vmatpush1.msra.mxu0 0.0
          %676 = vmatprep.subr.mxu0 0.0
          %677 = vmatpush1.msra.mxu0 0.0
          %678 = vmatprep.subr.mxu0 0.0
          %679 = vmatpush1.msra.mxu0 0.0
          %680 = vmatprep.subr.mxu0 0.0
          %681 = vmatpush1.msra.mxu0 0.0
          %682 = vmatprep.subr.mxu0 0.0
          %683 = vmatpush1.msra.mxu0 0.0
          %684 = vmatprep.subr.mxu0 0.0
          %685 = vmatpush1.msra.mxu0 0.0
          %686 = vmatprep.subr.mxu0 0.0
          %687 = vmatpush1.msra.mxu0 0.0
          %688 = vmatprep.subr.mxu0 0.0
          %689 = vmatpush1.msra.mxu0 0.0
          %690 = vmatprep.subr.mxu0 0.0
          %691 = vmatpush1.msra.mxu0 0.0
          %692 = vmatprep.mubr.f32.mxu0 0.0
          %693 = vmatmul.mubr.f32.gmra.mrb[0].mxu0 %v400
          %v694 = vpop.f32.mrb[0].mxu0
          %v695 = vadd.f32 0.0, %v694
          %v696 = vpop.f32.mrb[0].mxu0
          %697 = vmatprep.mubr.f32.mxu0 0.0
          %698 = vmatmul.mubr.f32.gmra.mrb[0].mxu0 %v403
          %v699 = vpop.f32.mrb[0].mxu0
          %v700 = vadd.f32 0.0, %v699
          %v701 = vpop.f32.mrb[0].mxu0
          %702 = vmatprep.mubr.f32.mxu0 0.0
          %703 = vmatmul.mubr.f32.gmra.mrb[0].mxu0 %v406
          %v704 = vpop.f32.mrb[0].mxu0
          %v705 = vadd.f32 0.0, %v704
          %v706 = vpop.f32.mrb[0].mxu0
          %707 = vmatprep.mubr.f32.mxu0 0.0
          %708 = vmatmul.mubr.f32.gmra.mrb[0].mxu0 %v409
          %v709 = vpop.f32.mrb[0].mxu0
          %v710 = vadd.f32 0.0, %v709
          %v711 = vpop.f32.mrb[0].mxu0
          %712 = vdwg.mxu0
          %vm713 = vcmask 7168
          %v714 = vsel %vm713, %v695, 0.0
          %v715 = vsel %vm713, %v700, 0.0
          %v716 = vadd.f32 %v714, %v715
          %v717 = vsel %vm713, %v705, 0.0
          %v718 = vadd.f32 %v716, %v717
          %v719 = vsel %vm713, %v710, 0.0
          %v720 = vadd.f32 %v718, %v719
          %721 = vadd.xlane.f32.xlu0 %v720
          %v722 = vpop.xlane.xlu0 %721
          %v723 = vrot.slane %v722, 4
          %v724 = vadd.f32 %v722, %v723
          %v725 = vrot.slane %v724, 2
          %v726 = vadd.f32 %v724, %v725
          %v727 = vrot.slane %v726, 1
          %v728 = vadd.f32 %v726, %v727
          %s729 = vtos %v728
          %v730 = vld [vmem:[#allocation3] sm:$0xf]
          %v732 = vsel %vm243, %v730, 0
          %734 = vmatprep.subr.mxu0 0.0
          %735 = vmatpush1.msra.mxu0 %v732
          %736 = vmatprep.subr.mxu0 0.0
          %737 = vmatpush1.msra.mxu0 0.0
          %738 = vmatprep.subr.mxu0 0.0
          %739 = vmatpush1.msra.mxu0 0.0
          %740 = vmatprep.subr.mxu0 0.0
          %741 = vmatpush1.msra.mxu0 0.0
          %742 = vmatprep.subr.mxu0 0.0
          %743 = vmatpush1.msra.mxu0 0.0
          %744 = vmatprep.subr.mxu0 0.0
          %745 = vmatpush1.msra.mxu0 0.0
          %746 = vmatprep.subr.mxu0 0.0
          %747 = vmatpush1.msra.mxu0 0.0
          %748 = vmatprep.subr.mxu0 0.0
          %749 = vmatpush1.msra.mxu0 0.0
          %750 = vmatprep.subr.mxu0 0.0
          %751 = vmatpush1.msra.mxu0 0.0
          %752 = vmatprep.subr.mxu0 0.0
          %753 = vmatpush1.msra.mxu0 0.0
          %754 = vmatprep.subr.mxu0 0.0
          %755 = vmatpush1.msra.mxu0 0.0
          %756 = vmatprep.subr.mxu0 0.0
          %757 = vmatpush1.msra.mxu0 0.0
          %758 = vmatprep.subr.mxu0 0.0
          %759 = vmatpush1.msra.mxu0 0.0
          %760 = vmatprep.subr.mxu0 0.0
          %761 = vmatpush1.msra.mxu0 0.0
          %762 = vmatprep.subr.mxu0 0.0
          %763 = vmatpush1.msra.mxu0 0.0
          %764 = vmatprep.subr.mxu0 0.0
          %765 = vmatpush1.msra.mxu0 0.0
          %766 = vmatprep.subr.mxu0 0.0
          %767 = vmatpush1.msra.mxu0 0.0
          %768 = vmatprep.subr.mxu0 0.0
          %769 = vmatpush1.msra.mxu0 0.0
          %770 = vmatprep.subr.mxu0 0.0
          %771 = vmatpush1.msra.mxu0 0.0
          %772 = vmatprep.subr.mxu0 0.0
          %773 = vmatpush1.msra.mxu0 0.0
          %774 = vmatprep.subr.mxu0 0.0
          %775 = vmatpush1.msra.mxu0 0.0
          %776 = vmatprep.subr.mxu0 0.0
          %777 = vmatpush1.msra.mxu0 0.0
          %778 = vmatprep.subr.mxu0 0.0
          %779 = vmatpush1.msra.mxu0 0.0
          %780 = vmatprep.subr.mxu0 0.0
          %781 = vmatpush1.msra.mxu0 0.0
          %782 = vmatprep.subr.mxu0 0.0
          %783 = vmatpush1.msra.mxu0 0.0
          %784 = vmatprep.subr.mxu0 0.0
          %785 = vmatpush1.msra.mxu0 0.0
          %786 = vmatprep.subr.mxu0 0.0
          %787 = vmatpush1.msra.mxu0 0.0
          %788 = vmatprep.subr.mxu0 0.0
          %789 = vmatpush1.msra.mxu0 0.0
          %790 = vmatprep.subr.mxu0 0.0
          %791 = vmatpush1.msra.mxu0 0.0
          %792 = vmatprep.subr.mxu0 0.0
          %793 = vmatpush1.msra.mxu0 0.0
          %794 = vmatprep.subr.mxu0 0.0
          %795 = vmatpush1.msra.mxu0 0.0
          %796 = vmatprep.subr.mxu0 0.0
          %797 = vmatpush1.msra.mxu0 0.0
          %798 = vmatprep.mubr.f32.mxu0 0.0
          %799 = vmatmul.mubr.f32.gmra.mrb[0].mxu0 %v400
          %v800 = vpop.f32.mrb[0].mxu0
          %v801 = vadd.f32 0.0, %v800
          %v802 = vpop.f32.mrb[0].mxu0
          %803 = vmatprep.mubr.f32.mxu0 0.0
          %804 = vmatmul.mubr.f32.gmra.mrb[0].mxu0 %v403
          %v805 = vpop.f32.mrb[0].mxu0
          %v806 = vadd.f32 0.0, %v805
          %v807 = vpop.f32.mrb[0].mxu0
          %808 = vmatprep.mubr.f32.mxu0 0.0
          %809 = vmatmul.mubr.f32.gmra.mrb[0].mxu0 %v406
          %v810 = vpop.f32.mrb[0].mxu0
          %v811 = vadd.f32 0.0, %v810
          %v812 = vpop.f32.mrb[0].mxu0
          %813 = vmatprep.mubr.f32.mxu0 0.0
          %814 = vmatmul.mubr.f32.gmra.mrb[0].mxu0 %v409
          %v815 = vpop.f32.mrb[0].mxu0
          %v816 = vadd.f32 0.0, %v815
          %v817 = vpop.f32.mrb[0].mxu0
          %818 = vdwg.mxu0
          %v819 = vmul.f32 %v801, %v234
          %v820 = vmul.f32 %v806, %v235
          %v821 = vmul.f32 %v811, %v236
          %v822 = vmul.f32 %v816, %v237
          %v823 = vsel %vm398, %v819, 0.0
          %v824 = vsel %vm398, %v820, 0.0
          %v825 = vadd.f32 %v823, %v824
          %v826 = vsel %vm398, %v821, 0.0
          %v827 = vadd.f32 %v825, %v826
          %v828 = vsel %vm398, %v822, 0.0
          %v829 = vadd.f32 %v827, %v828
          %830 = vadd.xlane.f32.xlu0 %v829
          %v831 = vpop.xlane.xlu0 %830
          %v832 = vrot.slane %v831, 4
          %v833 = vadd.f32 %v831, %v832
          %v834 = vrot.slane %v833, 2
          %v835 = vadd.f32 %v833, %v834
          %v836 = vrot.slane %v835, 1
          %v837 = vadd.f32 %v835, %v836
          %s838 = vtos %v837
          %s839 = smul.f32 %s729, 3.0517578e-05
          %s840 = smul.f32 %s838, 3.0517578e-05
          %s841 = smul.f32 %s839, %s839
          %s842 = ssub.f32 %s840, %s841
          %s843 = smax.f32 %s842, 0.0
          %s844 = sadd.f32 %s843, 1e-08
          %v845 = vstv %s844
          %v846 = vrsqrt.pop %v845
          %s847 = vtos %v846
          %v848 = vld [vmem:[%s2] sm:$0xff]
          %v849 = vld [vmem:[%s2 + $0x8] sm:$0xff]
          %v850 = vld [vmem:[%s2 + $0x10] sm:$0xff]
          %v851 = vld [vmem:[%s2 + $0x18] sm:$0xff]
          %v852 = vstv %s847
          %v853 = vmul.f32 %v848, %v852
          %v854 = vmul.f32 %v849, %v852
          %v855 = vmul.f32 %v850, %v852
          %v856 = vmul.f32 %v851, %v852
          %v857 = vld [vmem:[%s3] sm:$0xff]
          %v858 = vld [vmem:[%s3 + $0x8] sm:$0xff]
          %v859 = vld [vmem:[%s3 + $0x10] sm:$0xff]
          %v860 = vld [vmem:[%s3 + $0x18] sm:$0xff]
          %v861 = vstv %s839
          %v862 = vmul.f32 %v861, %v853
          %v863 = vmul.f32 %v861, %v854
          %v864 = vmul.f32 %v861, %v855
          %v865 = vmul.f32 %v861, %v856
          %v866 = vsub.f32 %v857, %v862
          %v867 = vsub.f32 %v858, %v863
          %v868 = vsub.f32 %v859, %v864
          %v869 = vsub.f32 %v860, %v865
          %v870 = vld [vmem:[%s213] sm:$0xff]
          %v871 = vld [vmem:[%s213 + $0x8] sm:$0xff]
          %v872 = vld [vmem:[%s213 + $0x10] sm:$0xff]
          %v873 = vld [vmem:[%s213 + $0x18] sm:$0xff]
          %v874 = vld [vmem:[%s213 + $0x20] sm:$0xff]
          %v875 = vld [vmem:[%s213 + $0x28] sm:$0xff]
          %v876 = vld [vmem:[%s213 + $0x30] sm:$0xff]
          %v877 = vld [vmem:[%s213 + $0x38] sm:$0xff]
          %v878 = vld [vmem:[%s213 + $0x40] sm:$0xff]
          %v879 = vld [vmem:[%s213 + $0x48] sm:$0xff]
          %v880 = vld [vmem:[%s213 + $0x50] sm:$0xff]
          %v881 = vld [vmem:[%s213 + $0x58] sm:$0xff]
          %v882 = vld [vmem:[%s213 + $0x60] sm:$0xff]
          %v883 = vld [vmem:[%s213 + $0x68] sm:$0xff]
          %v884 = vld [vmem:[%s213 + $0x70] sm:$0xff]
          %v885 = vld [vmem:[%s213 + $0x78] sm:$0xff]
          %v886 = vld [vmem:[%s213 + $0x80] sm:$0xff]
          %v887 = vld [vmem:[%s213 + $0x88] sm:$0xff]
          %v888 = vld [vmem:[%s213 + $0x90] sm:$0xff]
          %v889 = vld [vmem:[%s213 + $0x98] sm:$0xff]
          %v890 = vld [vmem:[%s213 + $0xa0] sm:$0xff]
          %v891 = vld [vmem:[%s213 + $0xa8] sm:$0xff]
          %v892 = vld [vmem:[%s213 + $0xb0] sm:$0xff]
          %v893 = vld [vmem:[%s213 + $0xb8] sm:$0xff]
          %v894 = vld [vmem:[%s213 + $0xc0] sm:$0xff]
          %v895 = vld [vmem:[%s213 + $0xc8] sm:$0xff]
          %v896 = vld [vmem:[%s213 + $0xd0] sm:$0xff]
          %v897 = vld [vmem:[%s213 + $0xd8] sm:$0xff]
          %v898 = vld [vmem:[%s213 + $0xe0] sm:$0xff]
          %v899 = vld [vmem:[%s213 + $0xe8] sm:$0xff]
          %v900 = vld [vmem:[%s213 + $0xf0] sm:$0xff]
          %v901 = vld [vmem:[%s213 + $0xf8] sm:$0xff]
          %903 = vset.pattern.permute.xlu0 0
          %904 = vperm.xlu0 %903, %v853
          %v905 = vpop.permute.xlu0 %904
          %908 = vset.pattern.permute.xlu0 0
          %909 = vperm.xlu0 %908, %v854
          %v910 = vpop.permute.xlu0 %909
          %913 = vset.pattern.permute.xlu0 0
          %914 = vperm.xlu0 %913, %v855
          %v915 = vpop.permute.xlu0 %914
          %918 = vset.pattern.permute.xlu0 0
          %919 = vperm.xlu0 %918, %v856
          %v920 = vpop.permute.xlu0 %919
          %v922 = vmul.f32 %v870, %v905
          %v923 = vmul.f32 %v871, %v905
          %v924 = vmul.f32 %v872, %v905
          %v925 = vmul.f32 %v873, %v905
          %v926 = vmul.f32 %v874, %v905
          %v927 = vmul.f32 %v875, %v905
          %v928 = vmul.f32 %v876, %v905
          %v929 = vmul.f32 %v877, %v905
          %v930 = vmul.f32 %v878, %v910
          %v931 = vmul.f32 %v879, %v910
          %v932 = vmul.f32 %v880, %v910
          %v933 = vmul.f32 %v881, %v910
          %v934 = vmul.f32 %v882, %v910
          %v935 = vmul.f32 %v883, %v910
          %v936 = vmul.f32 %v884, %v910
          %v937 = vmul.f32 %v885, %v910
          %v938 = vmul.f32 %v886, %v915
          %v939 = vmul.f32 %v887, %v915
          %v940 = vmul.f32 %v888, %v915
          %v941 = vmul.f32 %v889, %v915
          %v942 = vmul.f32 %v890, %v915
          %v943 = vmul.f32 %v891, %v915
          %v944 = vmul.f32 %v892, %v915
          %v945 = vmul.f32 %v893, %v915
          %v946 = vmul.f32 %v894, %v920
          %v947 = vmul.f32 %v895, %v920
          %v948 = vmul.f32 %v896, %v920
          %v949 = vmul.f32 %v897, %v920
          %v950 = vmul.f32 %v898, %v920
          %v951 = vmul.f32 %v899, %v920
          %v952 = vmul.f32 %v900, %v920
          %v953 = vmul.f32 %v901, %v920
          %955 = vset.pattern.permute.xlu0 0
          %956 = vperm.xlu0 %955, %v866
          %v957 = vpop.permute.xlu0 %956
          %960 = vset.pattern.permute.xlu0 0
          %961 = vperm.xlu0 %960, %v867
          %v962 = vpop.permute.xlu0 %961
          %965 = vset.pattern.permute.xlu0 0
          %966 = vperm.xlu0 %965, %v868
          %v967 = vpop.permute.xlu0 %966
          %970 = vset.pattern.permute.xlu0 0
          %971 = vperm.xlu0 %970, %v869
          %v972 = vpop.permute.xlu0 %971
          %v974 = vadd.f32 %v922, %v957
          %v975 = vadd.f32 %v923, %v957
          %v976 = vadd.f32 %v924, %v957
          %v977 = vadd.f32 %v925, %v957
          %v978 = vadd.f32 %v926, %v957
          %v979 = vadd.f32 %v927, %v957
          %v980 = vadd.f32 %v928, %v957
          %v981 = vadd.f32 %v929, %v957
          %v982 = vadd.f32 %v930, %v962
          %v983 = vadd.f32 %v931, %v962
          %v984 = vadd.f32 %v932, %v962
          %v985 = vadd.f32 %v933, %v962
          %v986 = vadd.f32 %v934, %v962
          %v987 = vadd.f32 %v935, %v962
          %v988 = vadd.f32 %v936, %v962
          %v989 = vadd.f32 %v937, %v962
          %v990 = vadd.f32 %v938, %v967
          %v991 = vadd.f32 %v939, %v967
          %v992 = vadd.f32 %v940, %v967
          %v993 = vadd.f32 %v941, %v967
          %v994 = vadd.f32 %v942, %v967
          %v995 = vadd.f32 %v943, %v967
          %v996 = vadd.f32 %v944, %v967
          %v997 = vadd.f32 %v945, %v967
          %v998 = vadd.f32 %v946, %v972
          %v999 = vadd.f32 %v947, %v972
          %v1000 = vadd.f32 %v948, %v972
          %v1001 = vadd.f32 %v949, %v972
          %v1002 = vadd.f32 %v950, %v972
          %v1003 = vadd.f32 %v951, %v972
          %v1004 = vadd.f32 %v952, %v972
          %v1005 = vadd.f32 %v953, %v972
          %1006 = vst [vmem:[%s213] sm:$0xff] %v974
          %1007 = vst [vmem:[%s213 + $0x8] sm:$0xff] %v975
          %1008 = vst [vmem:[%s213 + $0x10] sm:$0xff] %v976
          %1009 = vst [vmem:[%s213 + $0x18] sm:$0xff] %v977
          %1010 = vst [vmem:[%s213 + $0x20] sm:$0xff] %v978
          %1011 = vst [vmem:[%s213 + $0x28] sm:$0xff] %v979
          %1012 = vst [vmem:[%s213 + $0x30] sm:$0xff] %v980
          %1013 = vst [vmem:[%s213 + $0x38] sm:$0xff] %v981
          %1014 = vst [vmem:[%s213 + $0x40] sm:$0xff] %v982
          %1015 = vst [vmem:[%s213 + $0x48] sm:$0xff] %v983
          %1016 = vst [vmem:[%s213 + $0x50] sm:$0xff] %v984
          %1017 = vst [vmem:[%s213 + $0x58] sm:$0xff] %v985
          %1018 = vst [vmem:[%s213 + $0x60] sm:$0xff] %v986
          %1019 = vst [vmem:[%s213 + $0x68] sm:$0xff] %v987
          %1020 = vst [vmem:[%s213 + $0x70] sm:$0xff] %v988
          %1021 = vst [vmem:[%s213 + $0x78] sm:$0xff] %v989
          %1022 = vst [vmem:[%s213 + $0x80] sm:$0xff] %v990
          %1023 = vst [vmem:[%s213 + $0x88] sm:$0xff] %v991
          %1024 = vst [vmem:[%s213 + $0x90] sm:$0xff] %v992
          %1025 = vst [vmem:[%s213 + $0x98] sm:$0xff] %v993
          %1026 = vst [vmem:[%s213 + $0xa0] sm:$0xff] %v994
          %1027 = vst [vmem:[%s213 + $0xa8] sm:$0xff] %v995
          %1028 = vst [vmem:[%s213 + $0xb0] sm:$0xff] %v996
          %1029 = vst [vmem:[%s213 + $0xb8] sm:$0xff] %v997
          %1030 = vst [vmem:[%s213 + $0xc0] sm:$0xff] %v998
          %1031 = vst [vmem:[%s213 + $0xc8] sm:$0xff] %v999
          %1032 = vst [vmem:[%s213 + $0xd0] sm:$0xff] %v1000
          %1033 = vst [vmem:[%s213 + $0xd8] sm:$0xff] %v1001
          %1034 = vst [vmem:[%s213 + $0xe0] sm:$0xff] %v1002
          %1035 = vst [vmem:[%s213 + $0xe8] sm:$0xff] %v1003
          %1036 = vst [vmem:[%s213 + $0xf0] sm:$0xff] %v1004
          %1037 = vst [vmem:[%s213 + $0xf8] sm:$0xff] %v1005
        $region48: #{tpu_custom_call.1} parent=35 // pred_fallthru
          _
        %s1038 = sand.u32 %s129, 1
        %s1039 = scalar_lea.sflag [#allocation5], %s1038
        %s1040 = sand.u32 %s129, 1
        %s1041 = smul.addr %s1040, 256
        %s1042 = scalar_lea.vmem [#allocation4], %s1041
        // Predicated region
        $region49: #{tpu_custom_call.1} parent=35 // pred_check
          %p1043 = pneg %p139
        $region50: #{tpu_custom_call.1} parent=35 // pred_check_branch
          %1045 = sbr.rel (%p1043) target = $region52
        $region51: #{tpu_custom_call.1} parent=35 // pred_region
          %s1047 = ssub.s32 4096, 4096
          %1048 = vsyncadd %s1039, %s1047
          %s1049 = smul.addr %s22, 32
          %s1050 = smul.addr %s1049, 128
          %s1051 = scalar_lea.hbm %s4, %s1050
          %s1052 = sshll.u32 %s1042, 4
          %s1053 = int_to_ptr.vmem [resolvable:$true] %s1052
          %1058 = dma.vmem_to_hbm [thread:$0]  %s1053, 4096, %s1051, %s1039, 1024, 1024, 64
        $region52: #{tpu_custom_call.1} parent=35 // pred_fallthru
          _
      $region36: #{tpu_custom_call.1} parent=5 // pred_fallthru
        _
      %p1059 = scmp.le.s32.totalorder 2, %s13
      // Predicated region
      $region53: #{tpu_custom_call.1} parent=5 // pred_check
        %p1060 = pneg %p1059
      $region54: #{tpu_custom_call.1} parent=5 // pred_check_branch
        %1062 = sbr.rel (%p1060) target = $region56
      $region55: #{tpu_custom_call.1} parent=5 // pred_region
        %s1063 = ssub.s32 %s13, 2
        // Predicated region
        $region57: #{tpu_custom_call.1} parent=55 // pred_check
          %p1064 = pneg %p145
        $region58: #{tpu_custom_call.1} parent=55 // pred_check_branch
          %1066 = sbr.rel (%p1064) target = $region60
        $region59: #{tpu_custom_call.1} parent=55 // pred_region
          %s1067 = sand.u32 %s130, 1
          %s1068 = scalar_lea.sflag [#allocation5], %s1067
          %s1069 = sand.u32 %s130, 1
          %s1070 = smul.addr %s1069, 256
          %s1071 = scalar_lea.vmem [#allocation4], %s1070
          %1072 = dma.done %s1068, 4096
        $region60: #{tpu_custom_call.1} parent=55 // pred_fallthru
          _
      $region56: #{tpu_custom_call.1} parent=5 // pred_fallthru
        _
    $region6: #{tpu_custom_call.1} parent=1 // loop_footer
      %s17 = sadd.s32 1, %s13
    $region7: #{tpu_custom_call.1} parent=1 // loop_footer_branch
      %12 = sbr.rel target = $region3
    $region8: #{tpu_custom_call.1} parent=1 // loop_exit
      _
    %1073 = vsyncpa [#allocation5], 1
    %s1074 = scalar_lea.sflag [#allocation5], 1
    %1075 = vsyncpa %s1074, 1

</llo_original>
